<compile_context>
chip_gen: v5e
topology: v5e:2x2
jax: 0.10.0
libtpu: 0.0.40
codegen_flags: <defaults>
</compile_context>

<pallas_src>
import functools
import math

import jax
import jax.numpy as jnp
from jax.experimental import pallas as pl
from jax.experimental.pallas import tpu as pltpu


def _round_up(x, m):
    return ((x + m - 1) // m) * m


def _sinusoidal_kernel(time_ref, freqs_ref, out_ref, *, tb, half_dim):
    # time_ref:  (B_pad, 1)    f32, resident across the whole grid
    # freqs_ref: (1, half_dim) f32, resident across the whole grid
    # out_ref:   (TB, dim)     out_dtype; cols [:half_dim]=sin, [half_dim:]=cos
    i = pl.program_id(0)
    start = pl.multiple_of(i * tb, tb)
    t = time_ref[pl.ds(start, tb), :]            # (TB, 1)
    emb = t * freqs_ref[...]                     # (TB, half_dim) f32 outer product
    out_ref[:, :half_dim] = jnp.sin(emb).astype(out_ref.dtype)
    out_ref[:, half_dim:] = jnp.cos(emb).astype(out_ref.dtype)


def sinusoidal_position_embeddings(time, dim, *, block_b=2048, out_dtype=jnp.float32):
    """Pallas equivalent of SinusoidalPositionEmbeddings(dim)(time)."""
    assert time.ndim == 1, "time must be a 1-D tensor of timesteps"
    assert dim % 2 == 0, "dim must be even (odd dim would leave a column undefined)"
    half_dim = dim // 2
    assert half_dim > 1, "dim must be >= 4 (half_dim - 1 appears in a division)"

    B = time.shape[0]
    log_scale = math.log(10000.0) / (half_dim - 1)
    freqs = jnp.exp(
        jnp.arange(half_dim, dtype=jnp.float32) * (-log_scale)
    ).reshape(1, half_dim)

    # Batch tiling.  A (TB, dim) f32 block is small (block_b=2048 @ dim=512 is
    # 4 MiB, 8 MiB double-buffered), so VMEM is never the binding constraint,
    # even under v7x's 64 MiB.  Small batches run in one step (the op is
    # launch-bound there anyway); large batches get >= 2 "parallel" steps so
    # v7x can shard across its two TensorCores.
    B8 = _round_up(B, 8)
    if B8 > block_b:
        TB = block_b
    elif B8 >= 2048:
        TB = _round_up((B8 + 1) // 2, 8)     # >= 2 grid steps for v7x's 2 TCs
    else:
        TB = B8                              # single step; avoids padding when B % 8 == 0
    B_pad = _round_up(B8, TB)

    t2 = time.astype(jnp.float32).reshape(B, 1)
    if B_pad != B:
        t2 = jnp.pad(t2, ((0, B_pad - B), (0, 0)))   # padded rows sliced off below

    grid = (B_pad // TB,)
    kernel = functools.partial(_sinusoidal_kernel, tb=TB, half_dim=half_dim)

    out = pl.pallas_call(
        kernel,
        out_shape=jax.ShapeDtypeStruct((B_pad, dim), out_dtype),
        grid=grid,
        in_specs=[
            # Whole timestep vector, constant index_map -> stays resident (one DMA).
            pl.BlockSpec((B_pad, 1), lambda i: (0, 0)),
            # freqs: constant index_map -> stays resident.
            pl.BlockSpec((1, half_dim), lambda i: (0, 0)),
        ],
        # Lane-dense 2-D output block: full-width (TB, dim) stores, contiguous writeback.
        out_specs=pl.BlockSpec((TB, dim), lambda i: (i, 0)),
        compiler_params=pltpu.CompilerParams(
            dimension_semantics=("parallel",),       # v7x: shard B across its 2 TCs
        ),
    )(t2, freqs)

    return out[:B] if B_pad != B else out


def _reference(time, dim):
    """Pure-JAX reference mirroring the PyTorch forward exactly."""
    half_dim = dim // 2
    emb_scale = math.log(10000.0) / (half_dim - 1)
    freqs = jnp.exp(jnp.arange(half_dim, dtype=jnp.float32) * -emb_scale)
    emb = time.astype(jnp.float32)[:, None] * freqs[None, :]
    return jnp.concatenate([jnp.sin(emb), jnp.cos(emb)], axis=-1)


if __name__ == "__main__":
    key = jax.random.PRNGKey(0)

    # Case 1: small, typical diffusion-timestep batch — single grid step, no padding.
    B, dim = 8, 32
    time = jax.random.randint(key, (B,), 0, 1000).astype(jnp.float32)
    out = jax.block_until_ready(sinusoidal_position_embeddings(time, dim))
    ref = _reference(time, dim)
    assert out.shape == (B, dim), out.shape
    assert out.dtype == jnp.float32, out.dtype
    assert jnp.allclose(out, ref, atol=1e-5, rtol=1e-5), "mismatch vs reference (case 1)"

    # Case 2: ragged batch + multi-step grid (exercises padding, pipelining, and the
    # in-kernel dynamic slice of the resident timestep buffer).
    B2, dim2 = 20, 64
    time2 = jax.random.randint(jax.random.PRNGKey(1), (B2,), 0, 1000).astype(jnp.float32)
    out2 = jax.block_until_ready(
        sinusoidal_position_embeddings(time2, dim2, block_b=8)
    )
    ref2 = _reference(time2, dim2)
    assert out2.shape == (B2, dim2), out2.shape
    assert jnp.allclose(out2, ref2, atol=1e-5, rtol=1e-5), "mismatch vs reference (case 2)"

    # Case 3: dim a multiple of 128 (full unmasked (8,128) output tiles).
    B3, dim3 = 64, 256
    time3 = jax.random.randint(jax.random.PRNGKey(2), (B3,), 0, 1000).astype(jnp.float32)
    out3 = jax.block_until_ready(sinusoidal_position_embeddings(time3, dim3))
    ref3 = _reference(time3, dim3)
    assert out3.shape == (B3, dim3), out3.shape
    assert jnp.allclose(out3, ref3, atol=1e-5, rtol=1e-5), "mismatch vs reference (case 3)"

    print("KERNEL_OK")
</pallas_src>

<mosaic_0001>
module attributes {stable_mosaic.version = 11 : i64} {
  func.func @_sinusoidal_kernel(%arg0: i32, %arg1: memref<8x1xf32, #tpu.memory_space<vmem>>, %arg2: memref<1x16xf32, #tpu.memory_space<vmem>>, %arg3: memref<8x32xf32, #tpu.memory_space<vmem>>) attributes {dimension_semantics = [#tpu.dimension_semantics<parallel>], iteration_bounds = array<i64: 1>, scalar_prefetch = 0 : i64, scratch_operands = 0 : i64, tpu.core_type = #tpu.core_type<tc>, window_params = [{pipeline_mode = #tpu.pipeline_mode<synchronous>, transform_indices = @transform_0, window_bounds = array<i64: 8, 1>}, {pipeline_mode = #tpu.pipeline_mode<synchronous>, transform_indices = @transform_1, window_bounds = array<i64: 1, 16>}, {transform_indices = @transform_2, window_bounds = array<i64: 8, 32>}]} {
    %c8_i32 = arith.constant 8 : i32
    %0 = arith.muli %arg0, %c8_i32 : i32
    %1 = tpu.assume_multiple %0, 8 : i32
    %2 = arith.index_cast %1 : i32 to index
    %c0 = arith.constant 0 : index
    %3 = vector.load %arg1[%2, %c0] : memref<8x1xf32, #tpu.memory_space<vmem>>, vector<8x1xf32>
    %c0_0 = arith.constant 0 : index
    %c0_1 = arith.constant 0 : index
    %4 = vector.load %arg2[%c0_0, %c0_1] : memref<1x16xf32, #tpu.memory_space<vmem>>, vector<1x16xf32>
    %5 = vector.broadcast %3 : vector<8x1xf32> to vector<8x16xf32>
    %6 = vector.broadcast %4 : vector<1x16xf32> to vector<8x16xf32>
    %7 = arith.mulf %5, %6 : vector<8x16xf32>
    %8 = math.sin %7 : vector<8x16xf32>
    %c0_2 = arith.constant 0 : index
    %c0_3 = arith.constant 0 : index
    %9 = vector.load %arg3[%c0_2, %c0_3] : memref<8x32xf32, #tpu.memory_space<vmem>>, vector<8x16xf32>
    tpu.vector_store %arg3[%c0_2, %c0_3], %8 {strides = array<i32>} : memref<8x32xf32, #tpu.memory_space<vmem>>, vector<8x16xf32>,
    %10 = math.cos %7 : vector<8x16xf32>
    %c0_4 = arith.constant 0 : index
    %c16 = arith.constant 16 : index
    %11 = vector.load %arg3[%c0_4, %c16] : memref<8x32xf32, #tpu.memory_space<vmem>>, vector<8x16xf32>
    tpu.vector_store %arg3[%c0_4, %c16], %10 {strides = array<i32>} : memref<8x32xf32, #tpu.memory_space<vmem>>, vector<8x16xf32>,
    return
  }
  func.func @transform_0(%arg0: i32) -> (i32, i32) {
    %c0_i32 = arith.constant 0 : i32
    %c0_i32_0 = arith.constant 0 : i32
    %c0_i32_1 = arith.constant 0 : i32
    return %c0_i32, %c0_i32_0 : i32, i32
  }
  func.func @transform_1(%arg0: i32) -> (i32, i32) {
    %c0_i32 = arith.constant 0 : i32
    %c0_i32_0 = arith.constant 0 : i32
    %c0_i32_1 = arith.constant 0 : i32
    return %c0_i32, %c0_i32_0 : i32, i32
  }
  func.func @transform_2(%arg0: i32) -> (i32, i32) {
    %c0_i32 = arith.constant 0 : i32
    %c0_i32_0 = arith.constant 0 : i32
    return %arg0, %c0_i32 : i32, i32
  }
}

</mosaic_0001>

<llo_original>
// kernel: tpu_custom_call.1
$region0: #{tpu_custom_call.1}
  #allocation0 [shape = 'u32[]', space=smem, size = 0x4, offset = 0x4, fixed_abs, tag = 'smem constant byte address 0x4 - core index']
  #allocation1 [shape = 'u32[72,128]{1,0:T(1,128)}', space=vmem, size = 0x9000, scoped, tag = 'internal scratch']
  %s0 = inlined_call_operand.vmem [shape: f32[8,1], index: 0, kind: input, shape index: {}]
  %s1 = inlined_call_operand.vmem [shape: f32[1,16], index: 1, kind: input, shape index: {}]
  %s2 = inlined_call_operand.hbm [shape: f32[8,32], index: 2, kind: output, shape index: {}]
  %s3 = sld [smem:[#allocation0]]
  $region18: #{tpu_custom_call.1} parent=0
    _
  %s5 = ssub.s32 1, %s3
  %s6 = scalar_select 0, %s5, %s3
  $region1: #{tpu_custom_call.1} parent=0
    #allocation2 [shape = 'u8[4096]{0}', space=vmem, size = 0x1000, scoped, tag = 'output window, operand 0, single buffered']
    #allocation3 [shape = 's32[1]{0}', space=sflag, size = 0x4, scoped, tag = 'scoped memory for tpu_custom_call.1']
    %7 = vsyncpa [#allocation3], 0
    // Predicated region
    $region2: #{tpu_custom_call.1} parent=1 // pred_check
      _
    $region3: #{tpu_custom_call.1} parent=1 // pred_check_branch
      %9 = sbr.rel (0) target = $region5
    $region4: #{tpu_custom_call.1} parent=1 // pred_region
      _
    $region5: #{tpu_custom_call.1} parent=1 // pred_fallthru
      _
    // Predicated region
    $region6: #{tpu_custom_call.1} parent=1 // pred_check
      _
    $region7: #{tpu_custom_call.1} parent=1 // pred_check_branch
      %11 = sbr.rel (0) target = $region9
    $region8: #{tpu_custom_call.1} parent=1 // pred_region
      _
    $region9: #{tpu_custom_call.1} parent=1 // pred_fallthru
      _
    %s12 = smul.u32 0, 8
    %s13 = scalar_lea.vmem %s0, %s12
    %v14 = vld [vmem:[%s13] sm:$0xff]
    %v15 = vld [vmem:[%s1] sm:$0x1]
    %17 = vset.pattern.permute.xlu0 0
    %18 = vperm.xlu0 %17, %v14
    %v19 = vpop.permute.xlu0 %18
    %v22 = vperm.slane %v15, 0
    %v24 = vmul.f32 %v19, %v22
    %v25 = vand.u32 2147483647, %v24
    %vm26 = vcmp.le.f32.partialorder %v25, 0.7853982
    %vm27 = vcmp.lt.s32.totalorder %v24, 0
    %v28 = vand.u32 %v24, 2139095040
    %v29 = vshrl.u32 %v28, 23
    %v30 = vsub.s32 %v29, 127
    %v31 = vand.u32 2147483647, %v24
    %v32 = vand.u32 %v31, 8388607
    %v33 = vor.u32 %v32, 8388608
    %v34 = vsub.s32 0, %v33
    %v35 = vadd.s32 %v30, 1
    %vm36 = vcmp.gt.s32.totalorder %v35, 0
    %v37 = vsel %vm36, %v35, 0
    %v38 = vshrl.u32 %v37, 5
    %v39 = vand.u32 %v37, 31
    %v40 = vsub.s32 32, %v39
    %v41 = vshrl.u32 683565275, %v40
    %v42 = vshll.u32 683565275, %v39
    %v43 = vshrl.u32 2475754826, %v40
    %v44 = vor.u32 %v42, %v43
    %v45 = vshll.u32 2475754826, %v39
    %v46 = vshrl.u32 2131351028, %v40
    %v47 = vor.u32 %v45, %v46
    %v48 = vshll.u32 2131351028, %v39
    %v49 = vshrl.u32 2102212464, %v40
    %v50 = vor.u32 %v48, %v49
    %v51 = vshll.u32 2102212464, %v39
    %v52 = vshrl.u32 920167782, %v40
    %v53 = vor.u32 %v51, %v52
    %v54 = vshll.u32 920167782, %v39
    %v55 = vshrl.u32 1326507024, %v40
    %v56 = vor.u32 %v54, %v55
    %vm57 = vcmp.lt.s32.totalorder %v38, 1
    %vm58 = vcmp.lt.s32.totalorder %v38, 2
    %vm59 = vcmp.lt.s32.totalorder %v38, 3
    %vm60 = vcmp.lt.s32.totalorder %v38, 4
    %v61 = vsel %vm57, %v41, %v44
    %v62 = vsel %vm60, %v50, 2102212464
    %v63 = vsel %vm59, %v47, %v62
    %v64 = vsel %vm58, %v61, %v63
    %v65 = vsel %vm57, %v44, %v47
    %v66 = vsel %vm60, %v53, 920167782
    %v67 = vsel %vm59, %v50, %v66
    %v68 = vsel %vm58, %v65, %v67
    %v69 = vsel %vm57, %v47, %v50
    %v70 = vsel %vm60, %v56, 1326507024
    %v71 = vsel %vm59, %v53, %v70
    %v72 = vsel %vm58, %v69, %v71
    %v73 = vshll.u32 %v33, 8
    %v74 = vand.u32 %v73, 65535
    %v75 = vshrl.u32 %v73, 16
    %v76 = vand.u32 %v72, 65535
    %v77 = vshrl.u32 %v72, 16
    %v78 = vmul.u32 %v74, %v76
    %v79 = vmul.u32 %v74, %v77
    %v80 = vmul.u32 %v75, %v76
    %v81 = vmul.u32 %v75, %v77
    %v82 = vshll.u32 %v79, 16
    %v83 = vshrl.u32 %v79, 16
    %v84 = vshll.u32 %v80, 16
    %v85 = vshrl.u32 %v80, 16
    %vm86 = vc.u32 %v78, %v82
    %v87 = vsel %vm86, 1, 0
    %v88 = vadd.s32 %v78, %v82
    %v89 = vadd.s32 %v81, %v87
    %vm90 = vc.u32 %v88, %v84
    %v91 = vsel %vm90, 1, 0
    %v92 = vadd.s32 %v88, %v84
    %v93 = vadd.s32 %v89, %v91
    %v94 = vadd.s32 %v93, %v83
    %v95 = vadd.s32 %v94, %v85
    %v96 = vand.u32 %v73, 65535
    %v97 = vshrl.u32 %v73, 16
    %v98 = vand.u32 %v68, 65535
    %v99 = vshrl.u32 %v68, 16
    %v100 = vmul.u32 %v96, %v98
    %v101 = vmul.u32 %v96, %v99
    %v102 = vmul.u32 %v97, %v98
    %v103 = vmul.u32 %v97, %v99
    %v104 = vshll.u32 %v101, 16
    %v105 = vshrl.u32 %v101, 16
    %v106 = vshll.u32 %v102, 16
    %v107 = vshrl.u32 %v102, 16
    %vm108 = vc.u32 %v100, %v104
    %v109 = vsel %vm108, 1, 0
    %v110 = vadd.s32 %v100, %v104
    %v111 = vadd.s32 %v103, %v109
    %vm112 = vc.u32 %v110, %v106
    %v113 = vsel %vm112, 1, 0
    %v114 = vadd.s32 %v110, %v106
    %v115 = vadd.s32 %v111, %v113
    %v116 = vadd.s32 %v115, %v105
    %v117 = vadd.s32 %v116, %v107
    %v118 = vmul.u32 %v73, %v64
    %v119 = vadd.s32 %v95, %v114
    %vm120 = vc.u32 %v95, %v114
    %v121 = vadd.s32 %v117, 1
    %v122 = vsel %vm120, %v121, %v117
    %v123 = vadd.s32 %v118, %v122
    %v124 = vadd.s32 %v123, 536870912
    %v125 = vshrl.u32 %v124, 30
    %v126 = vshll.u32 %v125, 30
    %v127 = vsub.s32 %v123, %v126
    %vm128 = vcmp.lt.s32.totalorder %v127, 0
    %v129 = vsub.s32 0, %v127
    %v130 = vsel %vm128, %v129, %v127
    %v131 = vclz %v130
    %v132 = vsub.s32 %v131, 2
    %vm133 = vcmp.gt.s32.totalorder 0, %v132
    %v134 = vsel %vm133, 0, %v132
    %v135 = vsub.s32 32, %v134
    %v136 = vshll.u32 %v127, %v134
    %v137 = vshrl.u32 %v119, %v135
    %v138 = vor.u32 %v136, %v137
    %v139 = vsub.s32 4294967266, %v134
    %v140 = vadd.s32 %v139, 127
    %v141 = vshll.u32 %v140, 23
    %v142 = vor.u32 4788187, %v141
    %v143 = vand.u32 2147483647, %v142
    %v145 = vcvt.s32.f32 %v138
    %v146 = vmul.f32 %v145, %v143
    %v147 = vxor.u32 %v146, 2147483648
    %v148 = vsel %vm27, %v147, %v146
    %v149 = vsub.s32 4, %v125
    %v150 = vsel %vm27, %v149, %v125
    %v151 = vsel %vm26, %v24, %v148
    %v152 = vsel %vm26, 0, %v150
    %v153 = vmul.f32 %v151, %v151
    %v154 = vmul.f32 %v153, -0.001358992
    %v155 = vadd.f32 %v154, 0.041655596
    %v156 = vmul.f32 %v153, %v155
    %v157 = vadd.f32 %v156, -0.4999988
    %v158 = vmul.f32 %v153, %v157
    %v159 = vadd.f32 1.0, %v158
    %v160 = vmul.f32 %v151, %v151
    %v161 = vmul.f32 %v160, -0.00019511016
    %v162 = vadd.f32 %v161, 0.008332121
    %v163 = vmul.f32 %v160, %v162
    %v164 = vadd.f32 %v163, -0.16666654
    %v165 = vmul.f32 %v160, %v164
    %v166 = vadd.f32 %v165, 1.0
    %v167 = vmul.f32 %v166, %v151
    %vm168 = vweird.f32 %v24
    %v169 = vadd.s32 %v152, 3
    %v170 = vand.u32 %v169, 3
    %vm171 = vcmp.lt.s32.totalorder %v170, 2
    %vm172 = vcmp.eq.s32.totalorder %v170, 0
    %v173 = vxor.u32 %v167, 2147483648
    %v174 = vsel %vm172, %v159, %v173
    %vm175 = vcmp.eq.s32.totalorder %v170, 2
    %v176 = vxor.u32 %v159, 2147483648
    %v177 = vsel %vm175, %v176, %v167
    %v178 = vsel %vm171, %v174, %v177
    %v179 = vsel %vm168, nan, %v178
    %vm180 = vcmask 130048
    %181 = vst.msk [vmem:[#allocation2] sm:$0xff] %vm180, %v179
    %v182 = vand.u32 2147483647, %v24
    %vm183 = vcmp.le.f32.partialorder %v182, 0.7853982
    %vm184 = vcmp.lt.s32.totalorder %v24, 0
    %v185 = vand.u32 %v24, 2139095040
    %v186 = vshrl.u32 %v185, 23
    %v187 = vsub.s32 %v186, 127
    %v188 = vand.u32 2147483647, %v24
    %v189 = vand.u32 %v188, 8388607
    %v190 = vor.u32 %v189, 8388608
    %v191 = vsub.s32 0, %v190
    %v192 = vadd.s32 %v187, 1
    %vm193 = vcmp.gt.s32.totalorder %v192, 0
    %v194 = vsel %vm193, %v192, 0
    %v195 = vshrl.u32 %v194, 5
    %v196 = vand.u32 %v194, 31
    %v197 = vsub.s32 32, %v196
    %v198 = vshrl.u32 683565275, %v197
    %v199 = vshll.u32 683565275, %v196
    %v200 = vshrl.u32 2475754826, %v197
    %v201 = vor.u32 %v199, %v200
    %v202 = vshll.u32 2475754826, %v196
    %v203 = vshrl.u32 2131351028, %v197
    %v204 = vor.u32 %v202, %v203
    %v205 = vshll.u32 2131351028, %v196
    %v206 = vshrl.u32 2102212464, %v197
    %v207 = vor.u32 %v205, %v206
    %v208 = vshll.u32 2102212464, %v196
    %v209 = vshrl.u32 920167782, %v197
    %v210 = vor.u32 %v208, %v209
    %v211 = vshll.u32 920167782, %v196
    %v212 = vshrl.u32 1326507024, %v197
    %v213 = vor.u32 %v211, %v212
    %vm214 = vcmp.lt.s32.totalorder %v195, 1
    %vm215 = vcmp.lt.s32.totalorder %v195, 2
    %vm216 = vcmp.lt.s32.totalorder %v195, 3
    %vm217 = vcmp.lt.s32.totalorder %v195, 4
    %v218 = vsel %vm214, %v198, %v201
    %v219 = vsel %vm217, %v207, 2102212464
    %v220 = vsel %vm216, %v204, %v219
    %v221 = vsel %vm215, %v218, %v220
    %v222 = vsel %vm214, %v201, %v204
    %v223 = vsel %vm217, %v210, 920167782
    %v224 = vsel %vm216, %v207, %v223
    %v225 = vsel %vm215, %v222, %v224
    %v226 = vsel %vm214, %v204, %v207
    %v227 = vsel %vm217, %v213, 1326507024
    %v228 = vsel %vm216, %v210, %v227
    %v229 = vsel %vm215, %v226, %v228
    %v230 = vshll.u32 %v190, 8
    %v231 = vand.u32 %v230, 65535
    %v232 = vshrl.u32 %v230, 16
    %v233 = vand.u32 %v229, 65535
    %v234 = vshrl.u32 %v229, 16
    %v235 = vmul.u32 %v231, %v233
    %v236 = vmul.u32 %v231, %v234
    %v237 = vmul.u32 %v232, %v233
    %v238 = vmul.u32 %v232, %v234
    %v239 = vshll.u32 %v236, 16
    %v240 = vshrl.u32 %v236, 16
    %v241 = vshll.u32 %v237, 16
    %v242 = vshrl.u32 %v237, 16
    %vm243 = vc.u32 %v235, %v239
    %v244 = vsel %vm243, 1, 0
    %v245 = vadd.s32 %v235, %v239
    %v246 = vadd.s32 %v238, %v244
    %vm247 = vc.u32 %v245, %v241
    %v248 = vsel %vm247, 1, 0
    %v249 = vadd.s32 %v245, %v241
    %v250 = vadd.s32 %v246, %v248
    %v251 = vadd.s32 %v250, %v240
    %v252 = vadd.s32 %v251, %v242
    %v253 = vand.u32 %v230, 65535
    %v254 = vshrl.u32 %v230, 16
    %v255 = vand.u32 %v225, 65535
    %v256 = vshrl.u32 %v225, 16
    %v257 = vmul.u32 %v253, %v255
    %v258 = vmul.u32 %v253, %v256
    %v259 = vmul.u32 %v254, %v255
    %v260 = vmul.u32 %v254, %v256
    %v261 = vshll.u32 %v258, 16
    %v262 = vshrl.u32 %v258, 16
    %v263 = vshll.u32 %v259, 16
    %v264 = vshrl.u32 %v259, 16
    %vm265 = vc.u32 %v257, %v261
    %v266 = vsel %vm265, 1, 0
    %v267 = vadd.s32 %v257, %v261
    %v268 = vadd.s32 %v260, %v266
    %vm269 = vc.u32 %v267, %v263
    %v270 = vsel %vm269, 1, 0
    %v271 = vadd.s32 %v267, %v263
    %v272 = vadd.s32 %v268, %v270
    %v273 = vadd.s32 %v272, %v262
    %v274 = vadd.s32 %v273, %v264
    %v275 = vmul.u32 %v230, %v221
    %v276 = vadd.s32 %v252, %v271
    %vm277 = vc.u32 %v252, %v271
    %v278 = vadd.s32 %v274, 1
    %v279 = vsel %vm277, %v278, %v274
    %v280 = vadd.s32 %v275, %v279
    %v281 = vadd.s32 %v280, 536870912
    %v282 = vshrl.u32 %v281, 30
    %v283 = vshll.u32 %v282, 30
    %v284 = vsub.s32 %v280, %v283
    %vm285 = vcmp.lt.s32.totalorder %v284, 0
    %v286 = vsub.s32 0, %v284
    %v287 = vsel %vm285, %v286, %v284
    %v288 = vclz %v287
    %v289 = vsub.s32 %v288, 2
    %vm290 = vcmp.gt.s32.totalorder 0, %v289
    %v291 = vsel %vm290, 0, %v289
    %v292 = vsub.s32 32, %v291
    %v293 = vshll.u32 %v284, %v291
    %v294 = vshrl.u32 %v276, %v292
    %v295 = vor.u32 %v293, %v294
    %v296 = vsub.s32 4294967266, %v291
    %v297 = vadd.s32 %v296, 127
    %v298 = vshll.u32 %v297, 23
    %v299 = vor.u32 4788187, %v298
    %v300 = vand.u32 2147483647, %v299
    %v302 = vcvt.s32.f32 %v295
    %v303 = vmul.f32 %v302, %v300
    %v304 = vxor.u32 %v303, 2147483648
    %v305 = vsel %vm184, %v304, %v303
    %v306 = vsub.s32 4, %v282
    %v307 = vsel %vm184, %v306, %v282
    %v308 = vsel %vm183, %v24, %v305
    %v309 = vsel %vm183, 0, %v307
    %v310 = vmul.f32 %v308, %v308
    %v311 = vmul.f32 %v310, -0.001358992
    %v312 = vadd.f32 %v311, 0.041655596
    %v313 = vmul.f32 %v310, %v312
    %v314 = vadd.f32 %v313, -0.4999988
    %v315 = vmul.f32 %v310, %v314
    %v316 = vadd.f32 1.0, %v315
    %v317 = vmul.f32 %v308, %v308
    %v318 = vmul.f32 %v317, -0.00019511016
    %v319 = vadd.f32 %v318, 0.008332121
    %v320 = vmul.f32 %v317, %v319
    %v321 = vadd.f32 %v320, -0.16666654
    %v322 = vmul.f32 %v317, %v321
    %v323 = vadd.f32 %v322, 1.0
    %v324 = vmul.f32 %v323, %v308
    %vm325 = vweird.f32 %v24
    %v326 = vand.u32 %v309, 3
    %vm327 = vcmp.lt.s32.totalorder %v326, 2
    %vm328 = vcmp.eq.s32.totalorder %v326, 0
    %v329 = vxor.u32 %v324, 2147483648
    %v330 = vsel %vm328, %v316, %v329
    %vm331 = vcmp.eq.s32.totalorder %v326, 2
    %v332 = vxor.u32 %v316, 2147483648
    %v333 = vsel %vm331, %v332, %v324
    %v334 = vsel %vm327, %v330, %v333
    %v335 = vsel %vm325, nan, %v334
    %337 = vrot.lane.b32.xlu0 %v335, 16
    %v338 = vpop.permute.xlu0 %337
    %vm340 = vcmask 261248
    %341 = vst.msk [vmem:[#allocation2] sm:$0xff] %vm340, %v338
    // Predicated region
    $region10: #{tpu_custom_call.1} parent=1 // pred_check
      _
    $region11: #{tpu_custom_call.1} parent=1 // pred_check_branch
      %343 = sbr.rel (0) target = $region13
    $region12: #{tpu_custom_call.1} parent=1 // pred_region
      %345 = vsyncadd [#allocation3], 0
      %s347 = sshll.u32 [#allocation2], 4
      %s348 = int_to_ptr.vmem [resolvable:$true] %s347
      %s349 = sshll.u32 %s2, 4
      %s350 = int_to_ptr.hbm [resolvable:$true] %s349
      %352 = dma.vmem_to_hbm [thread:$0]  %s348, 128, %s350, [#allocation3]
    $region13: #{tpu_custom_call.1} parent=1 // pred_fallthru
      _
    // Predicated region
    $region14: #{tpu_custom_call.1} parent=1 // pred_check
      _
    $region15: #{tpu_custom_call.1} parent=1 // pred_check_branch
      %354 = sbr.rel (0) target = $region17
    $region16: #{tpu_custom_call.1} parent=1 // pred_region
      %356 = dma.done [#allocation3], 128
    $region17: #{tpu_custom_call.1} parent=1 // pred_fallthru
      _
    %357 = vsyncpa [#allocation3], 1

</llo_original>
